<compile_context>
chip_gen: v5e
topology: v5e:2x2
jax: 0.10.0
libtpu: 0.0.40
codegen_flags: <defaults>
</compile_context>

<pallas_src>
import functools

import jax
import jax.numpy as jnp
from jax import lax
from jax.experimental import pallas as pl
from jax.experimental.pallas import tpu as pltpu


# ----------------------------------------------------------------------------
# Fused Pallas kernel
# ----------------------------------------------------------------------------
def _barlow_twins_fused_kernel(
    x_ref,                      # (2B, C, H*W)  stacked views, spatial on lane axis
    w0_ref, g0_ref, b0_ref,     # projector layer 0 (bias-free linear + BN affine)
    w1_ref, g1_ref, b1_ref,     # projector layer 1
    w2_ref,                     # projector layer 2 (bias-free linear)
    loss_ref,                   # (1,) scalar loss in SMEM
    *, n_per_view, batch_size, lambd,
):
    eps = 1e-5
    B = n_per_view

    # ---- backbone stand-in: global average pool over the spatial (lane) axis.
    # TODO(synk): the user-supplied backbone is arbitrary; GAP stands in here.
    x = jnp.mean(x_ref[...], axis=-1)                         # (2B, C)

    # Row mask selecting view-1 rows vs view-2 rows (cheap (2B,1) iota).
    row = lax.broadcasted_iota(jnp.int32, (2 * B, 1), 0)
    in_view1 = row < B

    def bn_per_view(h, g=None, b=None):
        # Training-mode BatchNorm1d (biased variance, eps=1e-5), statistics
        # computed independently for each view's B rows.
        h1 = h[:B]
        h2 = h[B:]
        m1 = jnp.mean(h1, axis=0, keepdims=True)
        v1 = jnp.mean((h1 - m1) ** 2, axis=0, keepdims=True)
        m2 = jnp.mean(h2, axis=0, keepdims=True)
        v2 = jnp.mean((h2 - m2) ** 2, axis=0, keepdims=True)
        m = jnp.where(in_view1, m1, m2)                       # (2B, D) via broadcast
        v = jnp.where(in_view1, v1, v2)
        hn = (h - m) * lax.rsqrt(v + eps)
        if g is not None:
            hn = hn * g + b
        return hn

    # ---- projector: Linear -> BN -> ReLU, Linear -> BN -> ReLU, Linear ------
    h = jnp.dot(x, w0_ref[...], preferred_element_type=jnp.float32)
    h = jnp.maximum(bn_per_view(h, g0_ref[...], b0_ref[...]), 0.0)
    h = jnp.dot(h, w1_ref[...], preferred_element_type=jnp.float32)
    h = jnp.maximum(bn_per_view(h, g1_ref[...], b1_ref[...]), 0.0)
    z = jnp.dot(h, w2_ref[...], preferred_element_type=jnp.float32)   # (2B, D)

    # ---- loss head -----------------------------------------------------------
    zn = bn_per_view(z)                                       # no-affine BN per view
    z1n = zn[:B]                                              # (B, D)
    # Fold the 1/batch_size scale into one operand: O(B*D) instead of O(D*D).
    z2n = zn[B:] * (1.0 / batch_size)                         # (B, D)

    # Cross-correlation on the MXU, contracting directly over the batch axis
    # (no transpose materialization):  c[i,j] = sum_b z1n[b,i] * z2n[b,j].
    c = lax.dot_general(
        z1n, z2n,
        dimension_numbers=(((0,), (0,)), ((), ())),
        preferred_element_type=jnp.float32,
    )                                                          # (D, D)
    # TODO(synk): torch.distributed.all_reduce(c) is a single-device no-op here.

    # Diagonal of c as an O(B*D) VPU reduction (no (D,D) iota/mask/select).
    diag = jnp.sum(z1n * z2n, axis=0, keepdims=True)           # (1, D)
    on_diag = jnp.sum((diag - 1.0) ** 2)
    off_diag = jnp.sum(c * c) - jnp.sum(diag * diag)
    loss_ref[0] = on_diag + lambd * off_diag


# ----------------------------------------------------------------------------
# Wrapper
# ----------------------------------------------------------------------------
def barlow_twins_loss(y1, y2, params, batch_size, lambd):
    B, C, H, W = y1.shape
    HID = params["w0"].shape[1]
    D = params["w2"].shape[1]

    # Stack both views once; everything downstream is a single fused kernel.
    x = jnp.concatenate([y1, y2], axis=0).reshape(2 * B, C, H * W)

    # Advisory cost estimate so XLA can schedule around the custom call.
    flops = (
        2 * B * C * H * W                       # global average pool
        + 2 * (2 * B) * C * HID                 # linear 0
        + 2 * 2 * (2 * B) * HID * HID           # linear 1, 2
        + 3 * 10 * (2 * B) * HID                # BN + ReLU passes (approx)
        + 2 * B * D * D                         # cross-correlation
        + 4 * D * D                             # loss reductions
    )
    param_bytes = sum(int(p.size) for p in params.values()) * 4
    cost = pl.CostEstimate(
        flops=int(flops),
        transcendentals=int(8 * HID),           # rsqrt lanes (approx)
        bytes_accessed=int(x.size * 4 + param_bytes + 4),
    )

    kernel = functools.partial(
        _barlow_twins_fused_kernel,
        n_per_view=B,
        batch_size=float(batch_size),
        lambd=float(lambd),
    )
    loss = pl.pallas_call(
        kernel,
        out_shape=jax.ShapeDtypeStruct((1,), jnp.float32),
        out_specs=pl.BlockSpec(memory_space=pltpu.MemorySpace.SMEM),
        cost_estimate=cost,
    )(
        x,
        params["w0"], params["g0"], params["b0"],
        params["w1"], params["g1"], params["b1"],
        params["w2"],
    )
    return loss[0]


# ----------------------------------------------------------------------------
# Pure-JAX reference (verification only; highest matmul precision)
# ----------------------------------------------------------------------------
def reference_loss(y1, y2, params, batch_size, lambd):
    hi = jax.lax.Precision.HIGHEST

    def backbone(x):
        return x.mean(axis=(2, 3))

    def bn(x, g=None, b=None):
        m = x.mean(0, keepdims=True)
        v = ((x - m) ** 2).mean(0, keepdims=True)
        xn = (x - m) / jnp.sqrt(v + 1e-5)
        if g is not None:
            xn = xn * g + b
        return xn

    def proj(x):
        h = jnp.dot(x, params["w0"], precision=hi)
        h = jnp.maximum(bn(h, params["g0"], params["b0"]), 0.0)
        h = jnp.dot(h, params["w1"], precision=hi)
        h = jnp.maximum(bn(h, params["g1"], params["b1"]), 0.0)
        return jnp.dot(h, params["w2"], precision=hi)

    z1 = proj(backbone(y1))
    z2 = proj(backbone(y2))
    c = jnp.dot(bn(z1).T, bn(z2), precision=hi) / batch_size
    d = jnp.diag(c)
    on_diag = jnp.sum((d - 1.0) ** 2)
    off_diag = jnp.sum(c ** 2) - jnp.sum(d ** 2)
    return on_diag + lambd * off_diag


# ----------------------------------------------------------------------------
# Main
# ----------------------------------------------------------------------------
if __name__ == "__main__":
    # Small, module-consistent shapes: NCHW inputs, model_output_dim = C = 16,
    # projector '32-32-32', batch_size = 8, lambd = 0.0051.
    B, C, H, W = 8, 16, 8, 8
    HID = 32
    LAMBD = 0.0051
    BATCH_SIZE = B

    key = jax.random.PRNGKey(0)
    k_y1, k_y2, k_w0, k_w1, k_w2 = jax.random.split(key, 5)

    y1 = jax.random.normal(k_y1, (B, C, H, W), dtype=jnp.float32)
    y2 = jax.random.normal(k_y2, (B, C, H, W), dtype=jnp.float32)

    # Deterministic parameter init (bias-free linear weights; BN gamma=1, beta=0).
    params = {
        "w0": 0.1 * jax.random.normal(k_w0, (C, HID), dtype=jnp.float32),
        "g0": jnp.ones((1, HID), dtype=jnp.float32),
        "b0": jnp.zeros((1, HID), dtype=jnp.float32),
        "w1": 0.1 * jax.random.normal(k_w1, (HID, HID), dtype=jnp.float32),
        "g1": jnp.ones((1, HID), dtype=jnp.float32),
        "b1": jnp.zeros((1, HID), dtype=jnp.float32),
        "w2": 0.1 * jax.random.normal(k_w2, (HID, HID), dtype=jnp.float32),
    }

    loss = barlow_twins_loss(y1, y2, params, BATCH_SIZE, LAMBD)
    loss = jax.block_until_ready(loss)

    ref = reference_loss(y1, y2, params, BATCH_SIZE, LAMBD)
    assert jnp.allclose(loss, ref, rtol=1e-3, atol=1e-3), (loss, ref)

    print("KERNEL_OK")
</pallas_src>

<mosaic_0001>
module attributes {stable_mosaic.version = 11 : i64} {
  func.func @_barlow_twins_fused_kernel(%arg0: memref<16x16x64xf32, #tpu.memory_space<vmem>>, %arg1: memref<16x32xf32, #tpu.memory_space<vmem>>, %arg2: memref<1x32xf32, #tpu.memory_space<vmem>>, %arg3: memref<1x32xf32, #tpu.memory_space<vmem>>, %arg4: memref<32x32xf32, #tpu.memory_space<vmem>>, %arg5: memref<1x32xf32, #tpu.memory_space<vmem>>, %arg6: memref<1x32xf32, #tpu.memory_space<vmem>>, %arg7: memref<32x32xf32, #tpu.memory_space<vmem>>, %arg8: memref<1xf32, #tpu.memory_space<smem>>) attributes {dimension_semantics = [], scalar_prefetch = 0 : i64, scratch_operands = 0 : i64, tpu.core_type = #tpu.core_type<tc>} {
    %c0 = arith.constant 0 : index
    %c0_0 = arith.constant 0 : index
    %c0_1 = arith.constant 0 : index
    %0 = vector.load %arg0[%c0, %c0_0, %c0_1] : memref<16x16x64xf32, #tpu.memory_space<vmem>>, vector<16x16x64xf32>
    %cst = arith.constant dense<0.000000e+00> : vector<16x16xf32>
    %1 = vector.multi_reduction <add>, %0, %cst [2] : vector<16x16x64xf32> to vector<16x16xf32>
    %cst_2 = arith.constant 6.400000e+01 : f32
    %2 = vector.broadcast %cst_2 : f32 to vector<16x16xf32>
    %3 = arith.divf %1, %2 : vector<16x16xf32>
    %4 = tpu.iota {dimensions = array<i32: 0>} : vector<16x1xi32>
    %c8_i32 = arith.constant 8 : i32
    %5 = vector.broadcast %c8_i32 : i32 to vector<16x1xi32>
    %6 = arith.cmpi slt, %4, %5 : vector<16x1xi32>
    %c0_3 = arith.constant 0 : index
    %c0_4 = arith.constant 0 : index
    %7 = vector.load %arg1[%c0_3, %c0_4] : memref<16x32xf32, #tpu.memory_space<vmem>>, vector<16x32xf32>
    %cst_5 = arith.constant dense<0.000000e+00> : vector<16x32xf32>
    %8 = tpu.matmul %3, %7, %cst_5 {dimension_numbers = #tpu.dot_dimension_numbers<[1], [0], [0], [1], [0, 0, 1, 1], [], []>} : vector<16x16xf32>, vector<16x32xf32>, vector<16x32xf32> -> vector<16x32xf32>
    %c0_6 = arith.constant 0 : index
    %c0_7 = arith.constant 0 : index
    %9 = vector.load %arg2[%c0_6, %c0_7] : memref<1x32xf32, #tpu.memory_space<vmem>>, vector<1x32xf32>
    %c0_8 = arith.constant 0 : index
    %c0_9 = arith.constant 0 : index
    %10 = vector.load %arg3[%c0_8, %c0_9] : memref<1x32xf32, #tpu.memory_space<vmem>>, vector<1x32xf32>
    %11 = vector.extract_strided_slice %8 {offsets = [0, 0], sizes = [8, 32], strides = [1, 1]} : vector<16x32xf32> to vector<8x32xf32>
    %12 = vector.extract_strided_slice %8 {offsets = [8, 0], sizes = [8, 32], strides = [1, 1]} : vector<16x32xf32> to vector<8x32xf32>
    %cst_10 = arith.constant dense<0.000000e+00> : vector<32xf32>
    %13 = vector.multi_reduction <add>, %11, %cst_10 [0] : vector<8x32xf32> to vector<32xf32>
    %14 = vector.shape_cast %13 : vector<32xf32> to vector<1x32xf32>
    %cst_11 = arith.constant 8.000000e+00 : f32
    %15 = vector.broadcast %cst_11 : f32 to vector<1x32xf32>
    %16 = arith.divf %14, %15 : vector<1x32xf32>
    %17 = vector.broadcast %16 : vector<1x32xf32> to vector<8x32xf32>
    %18 = arith.subf %11, %17 : vector<8x32xf32>
    %19 = arith.mulf %18, %18 : vector<8x32xf32>
    %cst_12 = arith.constant dense<0.000000e+00> : vector<32xf32>
    %20 = vector.multi_reduction <add>, %19, %cst_12 [0] : vector<8x32xf32> to vector<32xf32>
    %21 = vector.shape_cast %20 : vector<32xf32> to vector<1x32xf32>
    %cst_13 = arith.constant 8.000000e+00 : f32
    %22 = vector.broadcast %cst_13 : f32 to vector<1x32xf32>
    %23 = arith.divf %21, %22 : vector<1x32xf32>
    %cst_14 = arith.constant dense<0.000000e+00> : vector<32xf32>
    %24 = vector.multi_reduction <add>, %12, %cst_14 [0] : vector<8x32xf32> to vector<32xf32>
    %25 = vector.shape_cast %24 : vector<32xf32> to vector<1x32xf32>
    %cst_15 = arith.constant 8.000000e+00 : f32
    %26 = vector.broadcast %cst_15 : f32 to vector<1x32xf32>
    %27 = arith.divf %25, %26 : vector<1x32xf32>
    %28 = vector.broadcast %27 : vector<1x32xf32> to vector<8x32xf32>
    %29 = arith.subf %12, %28 : vector<8x32xf32>
    %30 = arith.mulf %29, %29 : vector<8x32xf32>
    %cst_16 = arith.constant dense<0.000000e+00> : vector<32xf32>
    %31 = vector.multi_reduction <add>, %30, %cst_16 [0] : vector<8x32xf32> to vector<32xf32>
    %32 = vector.shape_cast %31 : vector<32xf32> to vector<1x32xf32>
    %cst_17 = arith.constant 8.000000e+00 : f32
    %33 = vector.broadcast %cst_17 : f32 to vector<1x32xf32>
    %34 = arith.divf %32, %33 : vector<1x32xf32>
    %35 = vector.shape_cast %6 : vector<16x1xi1> to vector<16x1xi1>
    %36 = vector.broadcast %35 : vector<16x1xi1> to vector<16x32xi1>
    %37 = vector.shape_cast %16 : vector<1x32xf32> to vector<1x32xf32>
    %38 = vector.broadcast %37 : vector<1x32xf32> to vector<16x32xf32>
    %39 = vector.shape_cast %27 : vector<1x32xf32> to vector<1x32xf32>
    %40 = vector.broadcast %39 : vector<1x32xf32> to vector<16x32xf32>
    %41 = arith.select %36, %38, %40 : vector<16x32xi1>, vector<16x32xf32>
    %42 = vector.shape_cast %6 : vector<16x1xi1> to vector<16x1xi1>
    %43 = vector.broadcast %42 : vector<16x1xi1> to vector<16x32xi1>
    %44 = vector.shape_cast %23 : vector<1x32xf32> to vector<1x32xf32>
    %45 = vector.broadcast %44 : vector<1x32xf32> to vector<16x32xf32>
    %46 = vector.shape_cast %34 : vector<1x32xf32> to vector<1x32xf32>
    %47 = vector.broadcast %46 : vector<1x32xf32> to vector<16x32xf32>
    %48 = arith.select %43, %45, %47 : vector<16x32xi1>, vector<16x32xf32>
    %49 = arith.subf %8, %41 : vector<16x32xf32>
    %cst_18 = arith.constant 9.99999974E-6 : f32
    %50 = vector.broadcast %cst_18 : f32 to vector<16x32xf32>
    %51 = arith.addf %48, %50 : vector<16x32xf32>
    %52 = math.rsqrt %51 : vector<16x32xf32>
    %53 = arith.mulf %49, %52 : vector<16x32xf32>
    %54 = vector.broadcast %9 : vector<1x32xf32> to vector<16x32xf32>
    %55 = arith.mulf %53, %54 : vector<16x32xf32>
    %56 = vector.broadcast %10 : vector<1x32xf32> to vector<16x32xf32>
    %57 = arith.addf %55, %56 : vector<16x32xf32>
    %cst_19 = arith.constant 0.000000e+00 : f32
    %58 = vector.broadcast %cst_19 : f32 to vector<16x32xf32>
    %59 = arith.maximumf %57, %58 : vector<16x32xf32>
    %c0_20 = arith.constant 0 : index
    %c0_21 = arith.constant 0 : index
    %60 = vector.load %arg4[%c0_20, %c0_21] : memref<32x32xf32, #tpu.memory_space<vmem>>, vector<32x32xf32>
    %cst_22 = arith.constant dense<0.000000e+00> : vector<16x32xf32>
    %61 = tpu.matmul %59, %60, %cst_22 {dimension_numbers = #tpu.dot_dimension_numbers<[1], [0], [0], [1], [0, 0, 1, 1], [], []>} : vector<16x32xf32>, vector<32x32xf32>, vector<16x32xf32> -> vector<16x32xf32>
    %c0_23 = arith.constant 0 : index
    %c0_24 = arith.constant 0 : index
    %62 = vector.load %arg5[%c0_23, %c0_24] : memref<1x32xf32, #tpu.memory_space<vmem>>, vector<1x32xf32>
    %c0_25 = arith.constant 0 : index
    %c0_26 = arith.constant 0 : index
    %63 = vector.load %arg6[%c0_25, %c0_26] : memref<1x32xf32, #tpu.memory_space<vmem>>, vector<1x32xf32>
    %64 = vector.extract_strided_slice %61 {offsets = [0, 0], sizes = [8, 32], strides = [1, 1]} : vector<16x32xf32> to vector<8x32xf32>
    %65 = vector.extract_strided_slice %61 {offsets = [8, 0], sizes = [8, 32], strides = [1, 1]} : vector<16x32xf32> to vector<8x32xf32>
    %cst_27 = arith.constant dense<0.000000e+00> : vector<32xf32>
    %66 = vector.multi_reduction <add>, %64, %cst_27 [0] : vector<8x32xf32> to vector<32xf32>
    %67 = vector.shape_cast %66 : vector<32xf32> to vector<1x32xf32>
    %cst_28 = arith.constant 8.000000e+00 : f32
    %68 = vector.broadcast %cst_28 : f32 to vector<1x32xf32>
    %69 = arith.divf %67, %68 : vector<1x32xf32>
    %70 = vector.broadcast %69 : vector<1x32xf32> to vector<8x32xf32>
    %71 = arith.subf %64, %70 : vector<8x32xf32>
    %72 = arith.mulf %71, %71 : vector<8x32xf32>
    %cst_29 = arith.constant dense<0.000000e+00> : vector<32xf32>
    %73 = vector.multi_reduction <add>, %72, %cst_29 [0] : vector<8x32xf32> to vector<32xf32>
    %74 = vector.shape_cast %73 : vector<32xf32> to vector<1x32xf32>
    %cst_30 = arith.constant 8.000000e+00 : f32
    %75 = vector.broadcast %cst_30 : f32 to vector<1x32xf32>
    %76 = arith.divf %74, %75 : vector<1x32xf32>
    %cst_31 = arith.constant dense<0.000000e+00> : vector<32xf32>
    %77 = vector.multi_reduction <add>, %65, %cst_31 [0] : vector<8x32xf32> to vector<32xf32>
    %78 = vector.shape_cast %77 : vector<32xf32> to vector<1x32xf32>
    %cst_32 = arith.constant 8.000000e+00 : f32
    %79 = vector.broadcast %cst_32 : f32 to vector<1x32xf32>
    %80 = arith.divf %78, %79 : vector<1x32xf32>
    %81 = vector.broadcast %80 : vector<1x32xf32> to vector<8x32xf32>
    %82 = arith.subf %65, %81 : vector<8x32xf32>
    %83 = arith.mulf %82, %82 : vector<8x32xf32>
    %cst_33 = arith.constant dense<0.000000e+00> : vector<32xf32>
    %84 = vector.multi_reduction <add>, %83, %cst_33 [0] : vector<8x32xf32> to vector<32xf32>
    %85 = vector.shape_cast %84 : vector<32xf32> to vector<1x32xf32>
    %cst_34 = arith.constant 8.000000e+00 : f32
    %86 = vector.broadcast %cst_34 : f32 to vector<1x32xf32>
    %87 = arith.divf %85, %86 : vector<1x32xf32>
    %88 = vector.shape_cast %6 : vector<16x1xi1> to vector<16x1xi1>
    %89 = vector.broadcast %88 : vector<16x1xi1> to vector<16x32xi1>
    %90 = vector.shape_cast %69 : vector<1x32xf32> to vector<1x32xf32>
    %91 = vector.broadcast %90 : vector<1x32xf32> to vector<16x32xf32>
    %92 = vector.shape_cast %80 : vector<1x32xf32> to vector<1x32xf32>
    %93 = vector.broadcast %92 : vector<1x32xf32> to vector<16x32xf32>
    %94 = arith.select %89, %91, %93 : vector<16x32xi1>, vector<16x32xf32>
    %95 = vector.shape_cast %6 : vector<16x1xi1> to vector<16x1xi1>
    %96 = vector.broadcast %95 : vector<16x1xi1> to vector<16x32xi1>
    %97 = vector.shape_cast %76 : vector<1x32xf32> to vector<1x32xf32>
    %98 = vector.broadcast %97 : vector<1x32xf32> to vector<16x32xf32>
    %99 = vector.shape_cast %87 : vector<1x32xf32> to vector<1x32xf32>
    %100 = vector.broadcast %99 : vector<1x32xf32> to vector<16x32xf32>
    %101 = arith.select %96, %98, %100 : vector<16x32xi1>, vector<16x32xf32>
    %102 = arith.subf %61, %94 : vector<16x32xf32>
    %cst_35 = arith.constant 9.99999974E-6 : f32
    %103 = vector.broadcast %cst_35 : f32 to vector<16x32xf32>
    %104 = arith.addf %101, %103 : vector<16x32xf32>
    %105 = math.rsqrt %104 : vector<16x32xf32>
    %106 = arith.mulf %102, %105 : vector<16x32xf32>
    %107 = vector.broadcast %62 : vector<1x32xf32> to vector<16x32xf32>
    %108 = arith.mulf %106, %107 : vector<16x32xf32>
    %109 = vector.broadcast %63 : vector<1x32xf32> to vector<16x32xf32>
    %110 = arith.addf %108, %109 : vector<16x32xf32>
    %cst_36 = arith.constant 0.000000e+00 : f32
    %111 = vector.broadcast %cst_36 : f32 to vector<16x32xf32>
    %112 = arith.maximumf %110, %111 : vector<16x32xf32>
    %c0_37 = arith.constant 0 : index
    %c0_38 = arith.constant 0 : index
    %113 = vector.load %arg7[%c0_37, %c0_38] : memref<32x32xf32, #tpu.memory_space<vmem>>, vector<32x32xf32>
    %cst_39 = arith.constant dense<0.000000e+00> : vector<16x32xf32>
    %114 = tpu.matmul %112, %113, %cst_39 {dimension_numbers = #tpu.dot_dimension_numbers<[1], [0], [0], [1], [0, 0, 1, 1], [], []>} : vector<16x32xf32>, vector<32x32xf32>, vector<16x32xf32> -> vector<16x32xf32>
    %115 = vector.extract_strided_slice %114 {offsets = [0, 0], sizes = [8, 32], strides = [1, 1]} : vector<16x32xf32> to vector<8x32xf32>
    %116 = vector.extract_strided_slice %114 {offsets = [8, 0], sizes = [8, 32], strides = [1, 1]} : vector<16x32xf32> to vector<8x32xf32>
    %cst_40 = arith.constant dense<0.000000e+00> : vector<32xf32>
    %117 = vector.multi_reduction <add>, %115, %cst_40 [0] : vector<8x32xf32> to vector<32xf32>
    %118 = vector.shape_cast %117 : vector<32xf32> to vector<1x32xf32>
    %cst_41 = arith.constant 8.000000e+00 : f32
    %119 = vector.broadcast %cst_41 : f32 to vector<1x32xf32>
    %120 = arith.divf %118, %119 : vector<1x32xf32>
    %121 = vector.broadcast %120 : vector<1x32xf32> to vector<8x32xf32>
    %122 = arith.subf %115, %121 : vector<8x32xf32>
    %123 = arith.mulf %122, %122 : vector<8x32xf32>
    %cst_42 = arith.constant dense<0.000000e+00> : vector<32xf32>
    %124 = vector.multi_reduction <add>, %123, %cst_42 [0] : vector<8x32xf32> to vector<32xf32>
    %125 = vector.shape_cast %124 : vector<32xf32> to vector<1x32xf32>
    %cst_43 = arith.constant 8.000000e+00 : f32
    %126 = vector.broadcast %cst_43 : f32 to vector<1x32xf32>
    %127 = arith.divf %125, %126 : vector<1x32xf32>
    %cst_44 = arith.constant dense<0.000000e+00> : vector<32xf32>
    %128 = vector.multi_reduction <add>, %116, %cst_44 [0] : vector<8x32xf32> to vector<32xf32>
    %129 = vector.shape_cast %128 : vector<32xf32> to vector<1x32xf32>
    %cst_45 = arith.constant 8.000000e+00 : f32
    %130 = vector.broadcast %cst_45 : f32 to vector<1x32xf32>
    %131 = arith.divf %129, %130 : vector<1x32xf32>
    %132 = vector.broadcast %131 : vector<1x32xf32> to vector<8x32xf32>
    %133 = arith.subf %116, %132 : vector<8x32xf32>
    %134 = arith.mulf %133, %133 : vector<8x32xf32>
    %cst_46 = arith.constant dense<0.000000e+00> : vector<32xf32>
    %135 = vector.multi_reduction <add>, %134, %cst_46 [0] : vector<8x32xf32> to vector<32xf32>
    %136 = vector.shape_cast %135 : vector<32xf32> to vector<1x32xf32>
    %cst_47 = arith.constant 8.000000e+00 : f32
    %137 = vector.broadcast %cst_47 : f32 to vector<1x32xf32>
    %138 = arith.divf %136, %137 : vector<1x32xf32>
    %139 = vector.shape_cast %6 : vector<16x1xi1> to vector<16x1xi1>
    %140 = vector.broadcast %139 : vector<16x1xi1> to vector<16x32xi1>
    %141 = vector.shape_cast %120 : vector<1x32xf32> to vector<1x32xf32>
    %142 = vector.broadcast %141 : vector<1x32xf32> to vector<16x32xf32>
    %143 = vector.shape_cast %131 : vector<1x32xf32> to vector<1x32xf32>
    %144 = vector.broadcast %143 : vector<1x32xf32> to vector<16x32xf32>
    %145 = arith.select %140, %142, %144 : vector<16x32xi1>, vector<16x32xf32>
    %146 = vector.shape_cast %6 : vector<16x1xi1> to vector<16x1xi1>
    %147 = vector.broadcast %146 : vector<16x1xi1> to vector<16x32xi1>
    %148 = vector.shape_cast %127 : vector<1x32xf32> to vector<1x32xf32>
    %149 = vector.broadcast %148 : vector<1x32xf32> to vector<16x32xf32>
    %150 = vector.shape_cast %138 : vector<1x32xf32> to vector<1x32xf32>
    %151 = vector.broadcast %150 : vector<1x32xf32> to vector<16x32xf32>
    %152 = arith.select %147, %149, %151 : vector<16x32xi1>, vector<16x32xf32>
    %153 = arith.subf %114, %145 : vector<16x32xf32>
    %cst_48 = arith.constant 9.99999974E-6 : f32
    %154 = vector.broadcast %cst_48 : f32 to vector<16x32xf32>
    %155 = arith.addf %152, %154 : vector<16x32xf32>
    %156 = math.rsqrt %155 : vector<16x32xf32>
    %157 = arith.mulf %153, %156 : vector<16x32xf32>
    %158 = vector.extract_strided_slice %157 {offsets = [0, 0], sizes = [8, 32], strides = [1, 1]} : vector<16x32xf32> to vector<8x32xf32>
    %159 = vector.extract_strided_slice %157 {offsets = [8, 0], sizes = [8, 32], strides = [1, 1]} : vector<16x32xf32> to vector<8x32xf32>
    %cst_49 = arith.constant 1.250000e-01 : f32
    %160 = vector.broadcast %cst_49 : f32 to vector<8x32xf32>
    %161 = arith.mulf %159, %160 : vector<8x32xf32>
    %cst_50 = arith.constant dense<0.000000e+00> : vector<32x32xf32>
    %162 = tpu.matmul %158, %161, %cst_50 {dimension_numbers = #tpu.dot_dimension_numbers<[0], [0], [1], [1], [0, 1, 1, 1], [], []>} : vector<8x32xf32>, vector<8x32xf32>, vector<32x32xf32> -> vector<32x32xf32>
    %163 = arith.mulf %158, %161 : vector<8x32xf32>
    %cst_51 = arith.constant dense<0.000000e+00> : vector<32xf32>
    %164 = vector.multi_reduction <add>, %163, %cst_51 [0] : vector<8x32xf32> to vector<32xf32>
    %165 = vector.shape_cast %164 : vector<32xf32> to vector<1x32xf32>
    %cst_52 = arith.constant 1.000000e+00 : f32
    %166 = vector.broadcast %cst_52 : f32 to vector<1x32xf32>
    %167 = arith.subf %165, %166 : vector<1x32xf32>
    %168 = arith.mulf %167, %167 : vector<1x32xf32>
    %169 = vector.shape_cast %168 : vector<1x32xf32> to vector<1x1x32xf32>
    %cst_53 = arith.constant dense<0.000000e+00> : vector<1xf32>
    %170 = vector.multi_reduction <add>, %169, %cst_53 [1, 2] : vector<1x1x32xf32> to vector<1xf32>
    %171 = vector.shape_cast %170 : vector<1xf32> to vector<1x1x1xf32>
    %172 = vector.extract %171[0, 0, 0] : f32 from vector<1x1x1xf32>
    %173 = arith.mulf %162, %162 : vector<32x32xf32>
    %174 = vector.shape_cast %173 : vector<32x32xf32> to vector<1x32x32xf32>
    %cst_54 = arith.constant dense<0.000000e+00> : vector<1xf32>
    %175 = vector.multi_reduction <add>, %174, %cst_54 [1, 2] : vector<1x32x32xf32> to vector<1xf32>
    %176 = vector.shape_cast %175 : vector<1xf32> to vector<1x1x1xf32>
    %177 = vector.extract %176[0, 0, 0] : f32 from vector<1x1x1xf32>
    %178 = arith.mulf %165, %165 : vector<1x32xf32>
    %179 = vector.shape_cast %178 : vector<1x32xf32> to vector<1x1x32xf32>
    %cst_55 = arith.constant dense<0.000000e+00> : vector<1xf32>
    %180 = vector.multi_reduction <add>, %179, %cst_55 [1, 2] : vector<1x1x32xf32> to vector<1xf32>
    %181 = vector.shape_cast %180 : vector<1xf32> to vector<1x1x1xf32>
    %182 = vector.extract %181[0, 0, 0] : f32 from vector<1x1x1xf32>
    %183 = arith.subf %177, %182 : f32
    %cst_56 = arith.constant 5.100000e-03 : f32
    %184 = arith.mulf %cst_56, %183 : f32
    %185 = arith.addf %172, %184 : f32
    %c0_57 = arith.constant 0 : index
    %186 = memref.load %arg8[%c0_57] : memref<1xf32, #tpu.memory_space<smem>>
    memref.store %185, %arg8[%c0_57] : memref<1xf32, #tpu.memory_space<smem>>
    return
  }
}

</mosaic_0001>

<llo_original>
// kernel: tpu_custom_call.1
$region0: #{tpu_custom_call.1}
  #allocation0 [shape = 'u32[]', space=smem, size = 0x4, offset = 0x4, fixed_abs, tag = 'smem constant byte address 0x4 - core index']
  #allocation1 [shape = 'u32[72,128]{1,0:T(1,128)}', space=vmem, size = 0x9000, scoped, tag = 'internal scratch']
  %s0 = inlined_call_operand.hbm [shape: f32[16,16,64], index: 0, kind: input, shape index: {}]
  %s1 = inlined_call_operand.hbm [shape: f32[16,32], index: 1, kind: input, shape index: {}]
  %s2 = inlined_call_operand.vmem [shape: f32[1,32], index: 2, kind: input, shape index: {}]
  %s3 = inlined_call_operand.vmem [shape: f32[1,32], index: 3, kind: input, shape index: {}]
  %s4 = inlined_call_operand.hbm [shape: f32[32,32], index: 4, kind: input, shape index: {}]
  %s5 = inlined_call_operand.vmem [shape: f32[1,32], index: 5, kind: input, shape index: {}]
  %s6 = inlined_call_operand.vmem [shape: f32[1,32], index: 6, kind: input, shape index: {}]
  %s7 = inlined_call_operand.hbm [shape: f32[32,32], index: 7, kind: input, shape index: {}]
  %s8 = inlined_call_operand.hbm [shape: f32[1], index: 8, kind: output, shape index: {}]
  %s9 = sld [smem:[#allocation0]]
  $region58: #{tpu_custom_call.1} parent=0
    _
  %s11 = ssub.s32 1, %s9
  %s12 = scalar_select 0, %s11, %s9
  $region1: #{tpu_custom_call.1} parent=0
    #allocation2 [shape = 'u8[131072]{0}', space=vmem, size = 0x20000, scoped, tag = 'input window, operand 0, single buffered']
    #allocation3 [shape = 's32[1]{0}', space=sflag, size = 0x4, scoped, tag = 'scoped memory for tpu_custom_call.1']
    #allocation4 [shape = 's32[1]{0}', space=sflag, size = 0x4, scoped, tag = 'scoped memory for tpu_custom_call.1']
    #allocation5 [shape = 'u8[8192]{0}', space=vmem, size = 0x2000, scoped, tag = 'input window, operand 1, single buffered']
    #allocation6 [shape = 's32[1]{0}', space=sflag, size = 0x4, scoped, tag = 'scoped memory for tpu_custom_call.1']
    #allocation7 [shape = 'u8[16384]{0}', space=vmem, size = 0x4000, scoped, tag = 'input window, operand 4, single buffered']
    #allocation8 [shape = 'u8[16384]{0}', space=vmem, size = 0x4000, scoped, tag = 'input window, operand 7, single buffered']
    #allocation9 [shape = 's32[1]{0}', space=sflag, size = 0x4, scoped, tag = 'scoped memory for tpu_custom_call.1']
    #allocation10 [shape = 'u8[512]{0}', space=smem, size = 0x200, scoped, tag = 'output window, operand 0, single buffered']
    %13 = vsyncpa [#allocation3], 0
    %14 = vsyncpa [#allocation6], 0
    %15 = vsyncpa [#allocation9], 0
    %16 = vsyncpa [#allocation4], 0
    // Predicated region
    $region2: #{tpu_custom_call.1} parent=1 // pred_check
      _
    $region3: #{tpu_custom_call.1} parent=1 // pred_check_branch
      %18 = sbr.rel (0) target = $region5
    $region4: #{tpu_custom_call.1} parent=1 // pred_region
      %20 = vsyncadd [#allocation3], 0
      %s21 = sshll.u32 %s0, 4
      %s22 = int_to_ptr.hbm [resolvable:$true] %s21
      %s23 = sshll.u32 [#allocation2], 4
      %s24 = int_to_ptr.vmem [resolvable:$true] %s23
      %29 = dma.hbm_to_vmem [thread:$0]  %s22, 4096, %s24, [#allocation3], 128, 128, 8
    $region5: #{tpu_custom_call.1} parent=1 // pred_fallthru
      _
    // Predicated region
    $region6: #{tpu_custom_call.1} parent=1 // pred_check
      _
    $region7: #{tpu_custom_call.1} parent=1 // pred_check_branch
      %31 = sbr.rel (0) target = $region9
    $region8: #{tpu_custom_call.1} parent=1 // pred_region
      %33 = vsyncadd [#allocation6], 0
      %s34 = sshll.u32 %s1, 4
      %s35 = int_to_ptr.hbm [resolvable:$true] %s34
      %s36 = sshll.u32 [#allocation5], 4
      %s37 = int_to_ptr.vmem [resolvable:$true] %s36
      %42 = dma.hbm_to_vmem [thread:$0]  %s35, 256, %s37, [#allocation6], 128, 128, 8
    $region9: #{tpu_custom_call.1} parent=1 // pred_fallthru
      _
    // Predicated region
    $region10: #{tpu_custom_call.1} parent=1 // pred_check
      _
    $region11: #{tpu_custom_call.1} parent=1 // pred_check_branch
      %44 = sbr.rel (0) target = $region13
    $region12: #{tpu_custom_call.1} parent=1 // pred_region
      _
    $region13: #{tpu_custom_call.1} parent=1 // pred_fallthru
      _
    // Predicated region
    $region14: #{tpu_custom_call.1} parent=1 // pred_check
      _
    $region15: #{tpu_custom_call.1} parent=1 // pred_check_branch
      %46 = sbr.rel (0) target = $region17
    $region16: #{tpu_custom_call.1} parent=1 // pred_region
      _
    $region17: #{tpu_custom_call.1} parent=1 // pred_fallthru
      _
    // Predicated region
    $region18: #{tpu_custom_call.1} parent=1 // pred_check
      _
    $region19: #{tpu_custom_call.1} parent=1 // pred_check_branch
      %48 = sbr.rel (0) target = $region21
    $region20: #{tpu_custom_call.1} parent=1 // pred_region
      %50 = vsyncadd [#allocation6], 0
      %s51 = sshll.u32 %s4, 4
      %s52 = int_to_ptr.hbm [resolvable:$true] %s51
      %s53 = sshll.u32 [#allocation7], 4
      %s54 = int_to_ptr.vmem [resolvable:$true] %s53
      %59 = dma.hbm_to_vmem [thread:$0]  %s52, 512, %s54, [#allocation6], 128, 128, 8
    $region21: #{tpu_custom_call.1} parent=1 // pred_fallthru
      _
    // Predicated region
    $region22: #{tpu_custom_call.1} parent=1 // pred_check
      _
    $region23: #{tpu_custom_call.1} parent=1 // pred_check_branch
      %61 = sbr.rel (0) target = $region25
    $region24: #{tpu_custom_call.1} parent=1 // pred_region
      _
    $region25: #{tpu_custom_call.1} parent=1 // pred_fallthru
      _
    // Predicated region
    $region26: #{tpu_custom_call.1} parent=1 // pred_check
      _
    $region27: #{tpu_custom_call.1} parent=1 // pred_check_branch
      %63 = sbr.rel (0) target = $region29
    $region28: #{tpu_custom_call.1} parent=1 // pred_region
      _
    $region29: #{tpu_custom_call.1} parent=1 // pred_fallthru
      _
    // Predicated region
    $region30: #{tpu_custom_call.1} parent=1 // pred_check
      _
    $region31: #{tpu_custom_call.1} parent=1 // pred_check_branch
      %65 = sbr.rel (0) target = $region33
    $region32: #{tpu_custom_call.1} parent=1 // pred_region
      %67 = vsyncadd [#allocation9], 0
      %s68 = sshll.u32 %s7, 4
      %s69 = int_to_ptr.hbm [resolvable:$true] %s68
      %s70 = sshll.u32 [#allocation8], 4
      %s71 = int_to_ptr.vmem [resolvable:$true] %s70
      %76 = dma.hbm_to_vmem [thread:$0]  %s69, 512, %s71, [#allocation9], 128, 128, 8
    $region33: #{tpu_custom_call.1} parent=1 // pred_fallthru
      _
    // Predicated region
    $region34: #{tpu_custom_call.1} parent=1 // pred_check
      _
    $region35: #{tpu_custom_call.1} parent=1 // pred_check_branch
      %78 = sbr.rel (0) target = $region37
    $region36: #{tpu_custom_call.1} parent=1 // pred_region
      %80 = dma.done [#allocation3], 4096
    $region37: #{tpu_custom_call.1} parent=1 // pred_fallthru
      _
    // Predicated region
    $region38: #{tpu_custom_call.1} parent=1 // pred_check
      _
    $region39: #{tpu_custom_call.1} parent=1 // pred_check_branch
      %82 = sbr.rel (0) target = $region41
    $region40: #{tpu_custom_call.1} parent=1 // pred_region
      %84 = dma.done [#allocation6], 256
    $region41: #{tpu_custom_call.1} parent=1 // pred_fallthru
      _
    // Predicated region
    $region42: #{tpu_custom_call.1} parent=1 // pred_check
      _
    $region43: #{tpu_custom_call.1} parent=1 // pred_check_branch
      %86 = sbr.rel (0) target = $region45
    $region44: #{tpu_custom_call.1} parent=1 // pred_region
      %88 = dma.done [#allocation6], 512
    $region45: #{tpu_custom_call.1} parent=1 // pred_fallthru
      _
    // Predicated region
    $region46: #{tpu_custom_call.1} parent=1 // pred_check
      _
    $region47: #{tpu_custom_call.1} parent=1 // pred_check_branch
      %90 = sbr.rel (0) target = $region49
    $region48: #{tpu_custom_call.1} parent=1 // pred_region
      %92 = dma.done [#allocation9], 512
    $region49: #{tpu_custom_call.1} parent=1 // pred_fallthru
      _
    %v93 = vld [vmem:[#allocation2] sm:$0xff]
    %v94 = vld [vmem:[#allocation2 + $0x8] sm:$0xff]
    %v95 = vld [vmem:[#allocation2 + $0x10] sm:$0xff]
    %v96 = vld [vmem:[#allocation2 + $0x18] sm:$0xff]
    %v97 = vld [vmem:[#allocation2 + $0x20] sm:$0xff]
    %v98 = vld [vmem:[#allocation2 + $0x28] sm:$0xff]
    %v99 = vld [vmem:[#allocation2 + $0x30] sm:$0xff]
    %v100 = vld [vmem:[#allocation2 + $0x38] sm:$0xff]
    %v101 = vld [vmem:[#allocation2 + $0x40] sm:$0xff]
    %v102 = vld [vmem:[#allocation2 + $0x48] sm:$0xff]
    %v103 = vld [vmem:[#allocation2 + $0x50] sm:$0xff]
    %v104 = vld [vmem:[#allocation2 + $0x58] sm:$0xff]
    %v105 = vld [vmem:[#allocation2 + $0x60] sm:$0xff]
    %v106 = vld [vmem:[#allocation2 + $0x68] sm:$0xff]
    %v107 = vld [vmem:[#allocation2 + $0x70] sm:$0xff]
    %v108 = vld [vmem:[#allocation2 + $0x78] sm:$0xff]
    %v109 = vld [vmem:[#allocation2 + $0x80] sm:$0xff]
    %v110 = vld [vmem:[#allocation2 + $0x88] sm:$0xff]
    %v111 = vld [vmem:[#allocation2 + $0x90] sm:$0xff]
    %v112 = vld [vmem:[#allocation2 + $0x98] sm:$0xff]
    %v113 = vld [vmem:[#allocation2 + $0xa0] sm:$0xff]
    %v114 = vld [vmem:[#allocation2 + $0xa8] sm:$0xff]
    %v115 = vld [vmem:[#allocation2 + $0xb0] sm:$0xff]
    %v116 = vld [vmem:[#allocation2 + $0xb8] sm:$0xff]
    %v117 = vld [vmem:[#allocation2 + $0xc0] sm:$0xff]
    %v118 = vld [vmem:[#allocation2 + $0xc8] sm:$0xff]
    %v119 = vld [vmem:[#allocation2 + $0xd0] sm:$0xff]
    %v120 = vld [vmem:[#allocation2 + $0xd8] sm:$0xff]
    %v121 = vld [vmem:[#allocation2 + $0xe0] sm:$0xff]
    %v122 = vld [vmem:[#allocation2 + $0xe8] sm:$0xff]
    %v123 = vld [vmem:[#allocation2 + $0xf0] sm:$0xff]
    %v124 = vld [vmem:[#allocation2 + $0xf8] sm:$0xff]
    %vm125 = vcmask 523264
    %v126 = vsel %vm125, %v93, 0.0
    %127 = vadd.xlane.f32.xlu0 %v126
    %v128 = vpop.xlane.xlu0 %127
    %v129 = vsel %vm125, %v94, 0.0
    %130 = vadd.xlane.f32.xlu0 %v129
    %v131 = vpop.xlane.xlu0 %130
    %v132 = vsel %vm125, %v95, 0.0
    %133 = vadd.xlane.f32.xlu0 %v132
    %v134 = vpop.xlane.xlu0 %133
    %v135 = vsel %vm125, %v96, 0.0
    %136 = vadd.xlane.f32.xlu0 %v135
    %v137 = vpop.xlane.xlu0 %136
    %v138 = vsel %vm125, %v97, 0.0
    %139 = vadd.xlane.f32.xlu0 %v138
    %v140 = vpop.xlane.xlu0 %139
    %v141 = vsel %vm125, %v98, 0.0
    %142 = vadd.xlane.f32.xlu0 %v141
    %v143 = vpop.xlane.xlu0 %142
    %v144 = vsel %vm125, %v99, 0.0
    %145 = vadd.xlane.f32.xlu0 %v144
    %v146 = vpop.xlane.xlu0 %145
    %v147 = vsel %vm125, %v100, 0.0
    %148 = vadd.xlane.f32.xlu0 %v147
    %v149 = vpop.xlane.xlu0 %148
    %v150 = vsel %vm125, %v101, 0.0
    %151 = vadd.xlane.f32.xlu0 %v150
    %v152 = vpop.xlane.xlu0 %151
    %v153 = vsel %vm125, %v102, 0.0
    %154 = vadd.xlane.f32.xlu0 %v153
    %v155 = vpop.xlane.xlu0 %154
    %v156 = vsel %vm125, %v103, 0.0
    %157 = vadd.xlane.f32.xlu0 %v156
    %v158 = vpop.xlane.xlu0 %157
    %v159 = vsel %vm125, %v104, 0.0
    %160 = vadd.xlane.f32.xlu0 %v159
    %v161 = vpop.xlane.xlu0 %160
    %v162 = vsel %vm125, %v105, 0.0
    %163 = vadd.xlane.f32.xlu0 %v162
    %v164 = vpop.xlane.xlu0 %163
    %v165 = vsel %vm125, %v106, 0.0
    %166 = vadd.xlane.f32.xlu0 %v165
    %v167 = vpop.xlane.xlu0 %166
    %v168 = vsel %vm125, %v107, 0.0
    %169 = vadd.xlane.f32.xlu0 %v168
    %v170 = vpop.xlane.xlu0 %169
    %v171 = vsel %vm125, %v108, 0.0
    %172 = vadd.xlane.f32.xlu0 %v171
    %v173 = vpop.xlane.xlu0 %172
    %v174 = vsel %vm125, %v109, 0.0
    %175 = vadd.xlane.f32.xlu0 %v174
    %v176 = vpop.xlane.xlu0 %175
    %v177 = vsel %vm125, %v110, 0.0
    %178 = vadd.xlane.f32.xlu0 %v177
    %v179 = vpop.xlane.xlu0 %178
    %v180 = vsel %vm125, %v111, 0.0
    %181 = vadd.xlane.f32.xlu0 %v180
    %v182 = vpop.xlane.xlu0 %181
    %v183 = vsel %vm125, %v112, 0.0
    %184 = vadd.xlane.f32.xlu0 %v183
    %v185 = vpop.xlane.xlu0 %184
    %v186 = vsel %vm125, %v113, 0.0
    %187 = vadd.xlane.f32.xlu0 %v186
    %v188 = vpop.xlane.xlu0 %187
    %v189 = vsel %vm125, %v114, 0.0
    %190 = vadd.xlane.f32.xlu0 %v189
    %v191 = vpop.xlane.xlu0 %190
    %v192 = vsel %vm125, %v115, 0.0
    %193 = vadd.xlane.f32.xlu0 %v192
    %v194 = vpop.xlane.xlu0 %193
    %v195 = vsel %vm125, %v116, 0.0
    %196 = vadd.xlane.f32.xlu0 %v195
    %v197 = vpop.xlane.xlu0 %196
    %v198 = vsel %vm125, %v117, 0.0
    %199 = vadd.xlane.f32.xlu0 %v198
    %v200 = vpop.xlane.xlu0 %199
    %v201 = vsel %vm125, %v118, 0.0
    %202 = vadd.xlane.f32.xlu0 %v201
    %v203 = vpop.xlane.xlu0 %202
    %v204 = vsel %vm125, %v119, 0.0
    %205 = vadd.xlane.f32.xlu0 %v204
    %v206 = vpop.xlane.xlu0 %205
    %v207 = vsel %vm125, %v120, 0.0
    %208 = vadd.xlane.f32.xlu0 %v207
    %v209 = vpop.xlane.xlu0 %208
    %v210 = vsel %vm125, %v121, 0.0
    %211 = vadd.xlane.f32.xlu0 %v210
    %v212 = vpop.xlane.xlu0 %211
    %v213 = vsel %vm125, %v122, 0.0
    %214 = vadd.xlane.f32.xlu0 %v213
    %v215 = vpop.xlane.xlu0 %214
    %v216 = vsel %vm125, %v123, 0.0
    %217 = vadd.xlane.f32.xlu0 %v216
    %v218 = vpop.xlane.xlu0 %217
    %v219 = vsel %vm125, %v124, 0.0
    %220 = vadd.xlane.f32.xlu0 %v219
    %v221 = vpop.xlane.xlu0 %220
    %v222 = vrcp.pop 64.0
    %v223 = vmul.f32 64.0, %v222
    %v224 = vsub.f32 1.0, %v223
    %v225 = vmul.f32 %v222, %v224
    %v226 = vadd.f32 %v222, %v225
    %vm227 = vweird.f32 %v222
    %v228 = vsel %vm227, %v222, %v226
    %v229 = vmul.f32 %v128, %v228
    %v230 = vmul.f32 %v131, %v228
    %v231 = vmul.f32 %v134, %v228
    %v232 = vmul.f32 %v137, %v228
    %v233 = vmul.f32 %v140, %v228
    %v234 = vmul.f32 %v143, %v228
    %v235 = vmul.f32 %v146, %v228
    %v236 = vmul.f32 %v149, %v228
    %v237 = vmul.f32 %v152, %v228
    %v238 = vmul.f32 %v155, %v228
    %v239 = vmul.f32 %v158, %v228
    %v240 = vmul.f32 %v161, %v228
    %v241 = vmul.f32 %v164, %v228
    %v242 = vmul.f32 %v167, %v228
    %v243 = vmul.f32 %v170, %v228
    %v244 = vmul.f32 %v173, %v228
    %v245 = vmul.f32 %v176, %v228
    %v246 = vmul.f32 %v179, %v228
    %v247 = vmul.f32 %v182, %v228
    %v248 = vmul.f32 %v185, %v228
    %v249 = vmul.f32 %v188, %v228
    %v250 = vmul.f32 %v191, %v228
    %v251 = vmul.f32 %v194, %v228
    %v252 = vmul.f32 %v197, %v228
    %v253 = vmul.f32 %v200, %v228
    %v254 = vmul.f32 %v203, %v228
    %v255 = vmul.f32 %v206, %v228
    %v256 = vmul.f32 %v209, %v228
    %v257 = vmul.f32 %v212, %v228
    %v258 = vmul.f32 %v215, %v228
    %v259 = vmul.f32 %v218, %v228
    %v260 = vmul.f32 %v221, %v228
    %v261 = vlaneseq
    %v262 = vshrl.u32 %v261, 7
    %v263 = vadd.s32 %v262, 8
    %vm264 = vcmp.lt.s32.totalorder %v262, 8
    %vm265 = vcmp.lt.s32.totalorder %v263, 8
    %v266 = vld [vmem:[#allocation5] sm:$0xff]
    %v267 = vld [vmem:[#allocation5 + $0x8] sm:$0xff]
    %v300 = vlaneseq
    %v301 = vand.u32 %v300, 127
    %v302 = vperm.slane %v229, %v301
    %v303 = vadd.s32 %v301, 4294967288
    %v304 = vperm.slane %v230, %v303
    %vm305 = vcmask 130112
    %v306 = vsel %vm305, %v304, %v302
    %v307 = vperm.slane %v231, %v301
    %v308 = vperm.slane %v232, %v303
    %v309 = vsel %vm305, %v308, %v307
    %v310 = vperm.slane %v233, %v301
    %v311 = vperm.slane %v234, %v303
    %v312 = vsel %vm305, %v311, %v310
    %v313 = vperm.slane %v235, %v301
    %v314 = vperm.slane %v236, %v303
    %v315 = vsel %vm305, %v314, %v313
    %v316 = vperm.slane %v237, %v301
    %v317 = vperm.slane %v238, %v303
    %v318 = vsel %vm305, %v317, %v316
    %v319 = vperm.slane %v239, %v301
    %v320 = vperm.slane %v240, %v303
    %v321 = vsel %vm305, %v320, %v319
    %v322 = vperm.slane %v241, %v301
    %v323 = vperm.slane %v242, %v303
    %v324 = vsel %vm305, %v323, %v322
    %v325 = vperm.slane %v243, %v301
    %v326 = vperm.slane %v244, %v303
    %v327 = vsel %vm305, %v326, %v325
    %v328 = vperm.slane %v245, %v301
    %v329 = vperm.slane %v246, %v303
    %v330 = vsel %vm305, %v329, %v328
    %v331 = vperm.slane %v247, %v301
    %v332 = vperm.slane %v248, %v303
    %v333 = vsel %vm305, %v332, %v331
    %v334 = vperm.slane %v249, %v301
    %v335 = vperm.slane %v250, %v303
    %v336 = vsel %vm305, %v335, %v334
    %v337 = vperm.slane %v251, %v301
    %v338 = vperm.slane %v252, %v303
    %v339 = vsel %vm305, %v338, %v337
    %v340 = vperm.slane %v253, %v301
    %v341 = vperm.slane %v254, %v303
    %v342 = vsel %vm305, %v341, %v340
    %v343 = vperm.slane %v255, %v301
    %v344 = vperm.slane %v256, %v303
    %v345 = vsel %vm305, %v344, %v343
    %v346 = vperm.slane %v257, %v301
    %v347 = vperm.slane %v258, %v303
    %v348 = vsel %vm305, %v347, %v346
    %v349 = vperm.slane %v259, %v301
    %v350 = vperm.slane %v260, %v303
    %v351 = vsel %vm305, %v350, %v349
    %vm352 = vcmask 1041409
    %v353 = vsel %vm352, %v309, %v306
    %vm354 = vcmask 1042434
    %v355 = vsel %vm354, %v312, %v353
    %vm356 = vcmask 1043459
    %v357 = vsel %vm356, %v315, %v355
    %vm358 = vcmask 1044484
    %v359 = vsel %vm358, %v318, %v357
    %vm360 = vcmask 1045509
    %v361 = vsel %vm360, %v321, %v359
    %vm362 = vcmask 1046534
    %v363 = vsel %vm362, %v324, %v361
    %vm364 = vcmask 1047559
    %v365 = vsel %vm364, %v327, %v363
    %v366 = vsel %vm352, %v333, %v330
    %v367 = vsel %vm354, %v336, %v366
    %v368 = vsel %vm356, %v339, %v367
    %v369 = vsel %vm358, %v342, %v368
    %v370 = vsel %vm360, %v345, %v369
    %v371 = vsel %vm362, %v348, %v370
    %v372 = vsel %vm364, %v351, %v371
    %vm373 = vcmask 130048
    %v374 = vsel %vm373, %v365, 0
    %v376 = vsel %vm373, %v372, 0
    %378 = vmatpush.msra.mxu0 0.0
    %379 = vmatpush.msra.mxu0 0.0
    %380 = vmatpush.msra.mxu0 0.0
    %381 = vmatpush.msra.mxu0 0.0
    %382 = vmatpush.msra.mxu0 0.0
    %383 = vmatpush.msra.mxu0 0.0
    %384 = vmatpush.msra.mxu0 0.0
    %385 = vmatpush.msra.mxu0 0.0
    %386 = vmatpush.msra.mxu0 0.0
    %387 = vmatpush.msra.mxu0 0.0
    %388 = vmatpush.msra.mxu0 0.0
    %389 = vmatpush.msra.mxu0 0.0
    %390 = vmatpush.msra.mxu0 0.0
    %391 = vmatpush.msra.mxu0 0.0
    %392 = vmatpush.msra.mxu0 %v267
    %393 = vmatpush.msra.mxu0 %v266
    %394 = vmatmul.f32.gmra.mxu0 %v374
    %v395 = vpop.f32.mrf.mxu0
    %v396 = vadd.f32 0.0, %v395
    %397 = vmatmul.f32.gmra.mxu0 %v376
    %v398 = vpop.f32.mrf.mxu0
    %v399 = vadd.f32 0.0, %v398
    %400 = vdwg.mxu0
    %v401 = vld [vmem:[%s2] sm:$0x1]
    %v402 = vld [vmem:[%s3] sm:$0x1]
    %vm403 = vcmask 261120
    %v404 = vsel %vm403, %v396, 0.0
    %v405 = vrot.slane %v404, 4
    %v406 = vadd.f32 %v404, %v405
    %v407 = vrot.slane %v406, 2
    %v408 = vadd.f32 %v406, %v407
    %v409 = vrot.slane %v408, 1
    %v410 = vadd.f32 %v408, %v409
    %v411 = vrcp.pop 8.0
    %v412 = vmul.f32 8.0, %v411
    %v413 = vsub.f32 1.0, %v412
    %v414 = vmul.f32 %v411, %v413
    %v415 = vadd.f32 %v411, %v414
    %vm416 = vweird.f32 %v411
    %v417 = vsel %vm416, %v411, %v415
    %v418 = vmul.f32 %v410, %v417
    %v419 = vsub.f32 %v396, %v418
    %v420 = vmul.f32 %v419, %v419
    %v421 = vsel %vm403, %v420, 0.0
    %v422 = vrot.slane %v421, 4
    %v423 = vadd.f32 %v421, %v422
    %v424 = vrot.slane %v423, 2
    %v425 = vadd.f32 %v423, %v424
    %v426 = vrot.slane %v425, 1
    %v427 = vadd.f32 %v425, %v426
    %v428 = vmul.f32 %v427, %v417
    %v429 = vsel %vm403, %v399, 0.0
    %v430 = vrot.slane %v429, 4
    %v431 = vadd.f32 %v429, %v430
    %v432 = vrot.slane %v431, 2
    %v433 = vadd.f32 %v431, %v432
    %v434 = vrot.slane %v433, 1
    %v435 = vadd.f32 %v433, %v434
    %v436 = vmul.f32 %v435, %v417
    %v437 = vsub.f32 %v399, %v436
    %v438 = vmul.f32 %v437, %v437
    %v439 = vsel %vm403, %v438, 0.0
    %v440 = vrot.slane %v439, 4
    %v441 = vadd.f32 %v439, %v440
    %v442 = vrot.slane %v441, 2
    %v443 = vadd.f32 %v441, %v442
    %v444 = vrot.slane %v443, 1
    %v445 = vadd.f32 %v443, %v444
    %v446 = vmul.f32 %v445, %v417
    %v447 = vsel %vm264, 1, 0
    %v448 = vsel %vm265, 1, 0
    %vm449 = vcmp.eq.s32.totalorder %v447, 1
    %vm450 = vcmp.eq.s32.totalorder %v448, 1
    %v451 = vsel %vm449, %v418, %v436
    %v452 = vsel %vm450, %v418, %v436
    %v453 = vsel %vm449, %v428, %v446
    %v454 = vsel %vm450, %v428, %v446
    %v455 = vsub.f32 %v396, %v451
    %v456 = vsub.f32 %v399, %v452
    %v457 = vadd.f32 %v453, 1e-05
    %v458 = vadd.f32 %v454, 1e-05
    %v459 = vrsqrt.pop %v457
    %v460 = vmul.f32 %v459, %v457
    %v461 = vmul.f32 %v460, %v459
    %v462 = vmul.f32 0.5, %v461
    %v463 = vsub.f32 1.5, %v462
    %v464 = vmul.f32 %v459, %v463
    %vm465 = vweird.f32 %v457
    %vm466 = vweird.f32 %v459
    %vm467 = vmor %vm465, %vm466
    %v468 = vsel %vm467, %v459, %v464
    %v469 = vrsqrt.pop %v458
    %v470 = vmul.f32 %v469, %v458
    %v471 = vmul.f32 %v470, %v469
    %v472 = vmul.f32 0.5, %v471
    %v473 = vsub.f32 1.5, %v472
    %v474 = vmul.f32 %v469, %v473
    %vm475 = vweird.f32 %v458
    %vm476 = vweird.f32 %v469
    %vm477 = vmor %vm475, %vm476
    %v478 = vsel %vm477, %v469, %v474
    %v479 = vmul.f32 %v455, %v468
    %v480 = vmul.f32 %v456, %v478
    %v482 = vperm.slane %v401, 0
    %v484 = vmul.f32 %v479, %v482
    %v485 = vmul.f32 %v480, %v482
    %v487 = vperm.slane %v402, 0
    %v489 = vadd.f32 %v484, %v487
    %v490 = vadd.f32 %v485, %v487
    %v491 = vmax.f32 %v489, 0.0
    %v492 = vmax.f32 %v490, 0.0
    %v493 = vld [vmem:[#allocation7] sm:$0xff]
    %v494 = vld [vmem:[#allocation7 + $0x8] sm:$0xff]
    %v495 = vld [vmem:[#allocation7 + $0x10] sm:$0xff]
    %v496 = vld [vmem:[#allocation7 + $0x18] sm:$0xff]
    %v498 = vsel %vm403, %v491, 0
    %v501 = vsel %vm403, %v492, 0
    %503 = vmatpush.msra.mxu0 0.0
    %504 = vmatpush.msra.mxu0 0.0
    %505 = vmatpush.msra.mxu0 0.0
    %506 = vmatpush.msra.mxu0 0.0
    %507 = vmatpush.msra.mxu0 0.0
    %508 = vmatpush.msra.mxu0 0.0
    %509 = vmatpush.msra.mxu0 0.0
    %510 = vmatpush.msra.mxu0 0.0
    %511 = vmatpush.msra.mxu0 0.0
    %512 = vmatpush.msra.mxu0 0.0
    %513 = vmatpush.msra.mxu0 0.0
    %514 = vmatpush.msra.mxu0 0.0
    %515 = vmatpush.msra.mxu0 %v496
    %516 = vmatpush.msra.mxu0 %v495
    %517 = vmatpush.msra.mxu0 %v494
    %518 = vmatpush.msra.mxu0 %v493
    %519 = vmatmul.f32.gmra.mxu0 %v498
    %v520 = vpop.f32.mrf.mxu0
    %v521 = vadd.f32 0.0, %v520
    %522 = vmatmul.f32.gmra.mxu0 %v501
    %v523 = vpop.f32.mrf.mxu0
    %v524 = vadd.f32 0.0, %v523
    %525 = vdwg.mxu0
    %v526 = vld [vmem:[%s5] sm:$0x1]
    %v527 = vld [vmem:[%s6] sm:$0x1]
    %v528 = vsel %vm403, %v521, 0.0
    %v529 = vrot.slane %v528, 4
    %v530 = vadd.f32 %v528, %v529
    %v531 = vrot.slane %v530, 2
    %v532 = vadd.f32 %v530, %v531
    %v533 = vrot.slane %v532, 1
    %v534 = vadd.f32 %v532, %v533
    %v535 = vmul.f32 %v534, %v417
    %v536 = vsub.f32 %v521, %v535
    %v537 = vmul.f32 %v536, %v536
    %v538 = vsel %vm403, %v537, 0.0
    %v539 = vrot.slane %v538, 4
    %v540 = vadd.f32 %v538, %v539
    %v541 = vrot.slane %v540, 2
    %v542 = vadd.f32 %v540, %v541
    %v543 = vrot.slane %v542, 1
    %v544 = vadd.f32 %v542, %v543
    %v545 = vmul.f32 %v544, %v417
    %v546 = vsel %vm403, %v524, 0.0
    %v547 = vrot.slane %v546, 4
    %v548 = vadd.f32 %v546, %v547
    %v549 = vrot.slane %v548, 2
    %v550 = vadd.f32 %v548, %v549
    %v551 = vrot.slane %v550, 1
    %v552 = vadd.f32 %v550, %v551
    %v553 = vmul.f32 %v552, %v417
    %v554 = vsub.f32 %v524, %v553
    %v555 = vmul.f32 %v554, %v554
    %v556 = vsel %vm403, %v555, 0.0
    %v557 = vrot.slane %v556, 4
    %v558 = vadd.f32 %v556, %v557
    %v559 = vrot.slane %v558, 2
    %v560 = vadd.f32 %v558, %v559
    %v561 = vrot.slane %v560, 1
    %v562 = vadd.f32 %v560, %v561
    %v563 = vmul.f32 %v562, %v417
    %v564 = vsel %vm449, %v535, %v553
    %v565 = vsel %vm450, %v535, %v553
    %v566 = vsel %vm449, %v545, %v563
    %v567 = vsel %vm450, %v545, %v563
    %v568 = vsub.f32 %v521, %v564
    %v569 = vsub.f32 %v524, %v565
    %v570 = vadd.f32 %v566, 1e-05
    %v571 = vadd.f32 %v567, 1e-05
    %v572 = vrsqrt.pop %v570
    %v573 = vmul.f32 %v572, %v570
    %v574 = vmul.f32 %v573, %v572
    %v575 = vmul.f32 0.5, %v574
    %v576 = vsub.f32 1.5, %v575
    %v577 = vmul.f32 %v572, %v576
    %vm578 = vweird.f32 %v570
    %vm579 = vweird.f32 %v572
    %vm580 = vmor %vm578, %vm579
    %v581 = vsel %vm580, %v572, %v577
    %v582 = vrsqrt.pop %v571
    %v583 = vmul.f32 %v582, %v571
    %v584 = vmul.f32 %v583, %v582
    %v585 = vmul.f32 0.5, %v584
    %v586 = vsub.f32 1.5, %v585
    %v587 = vmul.f32 %v582, %v586
    %vm588 = vweird.f32 %v571
    %vm589 = vweird.f32 %v582
    %vm590 = vmor %vm588, %vm589
    %v591 = vsel %vm590, %v582, %v587
    %v592 = vmul.f32 %v568, %v581
    %v593 = vmul.f32 %v569, %v591
    %v595 = vperm.slane %v526, 0
    %v597 = vmul.f32 %v592, %v595
    %v598 = vmul.f32 %v593, %v595
    %v600 = vperm.slane %v527, 0
    %v602 = vadd.f32 %v597, %v600
    %v603 = vadd.f32 %v598, %v600
    %v604 = vmax.f32 %v602, 0.0
    %v605 = vmax.f32 %v603, 0.0
    %v606 = vld [vmem:[#allocation8] sm:$0xff]
    %v607 = vld [vmem:[#allocation8 + $0x8] sm:$0xff]
    %v608 = vld [vmem:[#allocation8 + $0x10] sm:$0xff]
    %v609 = vld [vmem:[#allocation8 + $0x18] sm:$0xff]
    %v611 = vsel %vm403, %v604, 0
    %v614 = vsel %vm403, %v605, 0
    %616 = vmatpush.msra.mxu0 0.0
    %617 = vmatpush.msra.mxu0 0.0
    %618 = vmatpush.msra.mxu0 0.0
    %619 = vmatpush.msra.mxu0 0.0
    %620 = vmatpush.msra.mxu0 0.0
    %621 = vmatpush.msra.mxu0 0.0
    %622 = vmatpush.msra.mxu0 0.0
    %623 = vmatpush.msra.mxu0 0.0
    %624 = vmatpush.msra.mxu0 0.0
    %625 = vmatpush.msra.mxu0 0.0
    %626 = vmatpush.msra.mxu0 0.0
    %627 = vmatpush.msra.mxu0 0.0
    %628 = vmatpush.msra.mxu0 %v609
    %629 = vmatpush.msra.mxu0 %v608
    %630 = vmatpush.msra.mxu0 %v607
    %631 = vmatpush.msra.mxu0 %v606
    %632 = vmatmul.f32.gmra.mxu0 %v611
    %v633 = vpop.f32.mrf.mxu0
    %v634 = vadd.f32 0.0, %v633
    %635 = vmatmul.f32.gmra.mxu0 %v614
    %v636 = vpop.f32.mrf.mxu0
    %v637 = vadd.f32 0.0, %v636
    %638 = vdwg.mxu0
    %v639 = vsel %vm403, %v634, 0.0
    %v640 = vrot.slane %v639, 4
    %v641 = vadd.f32 %v639, %v640
    %v642 = vrot.slane %v641, 2
    %v643 = vadd.f32 %v641, %v642
    %v644 = vrot.slane %v643, 1
    %v645 = vadd.f32 %v643, %v644
    %v646 = vmul.f32 %v645, %v417
    %v647 = vsub.f32 %v634, %v646
    %v648 = vmul.f32 %v647, %v647
    %v649 = vsel %vm403, %v648, 0.0
    %v650 = vrot.slane %v649, 4
    %v651 = vadd.f32 %v649, %v650
    %v652 = vrot.slane %v651, 2
    %v653 = vadd.f32 %v651, %v652
    %v654 = vrot.slane %v653, 1
    %v655 = vadd.f32 %v653, %v654
    %v656 = vmul.f32 %v655, %v417
    %v657 = vsel %vm403, %v637, 0.0
    %v658 = vrot.slane %v657, 4
    %v659 = vadd.f32 %v657, %v658
    %v660 = vrot.slane %v659, 2
    %v661 = vadd.f32 %v659, %v660
    %v662 = vrot.slane %v661, 1
    %v663 = vadd.f32 %v661, %v662
    %v664 = vmul.f32 %v663, %v417
    %v665 = vsub.f32 %v637, %v664
    %v666 = vmul.f32 %v665, %v665
    %v667 = vsel %vm403, %v666, 0.0
    %v668 = vrot.slane %v667, 4
    %v669 = vadd.f32 %v667, %v668
    %v670 = vrot.slane %v669, 2
    %v671 = vadd.f32 %v669, %v670
    %v672 = vrot.slane %v671, 1
    %v673 = vadd.f32 %v671, %v672
    %v674 = vmul.f32 %v673, %v417
    %v675 = vsel %vm449, %v646, %v664
    %v676 = vsel %vm450, %v646, %v664
    %v677 = vsel %vm449, %v656, %v674
    %v678 = vsel %vm450, %v656, %v674
    %v679 = vsub.f32 %v634, %v675
    %v680 = vsub.f32 %v637, %v676
    %v681 = vadd.f32 %v677, 1e-05
    %v682 = vadd.f32 %v678, 1e-05
    %v683 = vrsqrt.pop %v681
    %v684 = vmul.f32 %v683, %v681
    %v685 = vmul.f32 %v684, %v683
    %v686 = vmul.f32 0.5, %v685
    %v687 = vsub.f32 1.5, %v686
    %v688 = vmul.f32 %v683, %v687
    %vm689 = vweird.f32 %v681
    %vm690 = vweird.f32 %v683
    %vm691 = vmor %vm689, %vm690
    %v692 = vsel %vm691, %v683, %v688
    %v693 = vrsqrt.pop %v682
    %v694 = vmul.f32 %v693, %v682
    %v695 = vmul.f32 %v694, %v693
    %v696 = vmul.f32 0.5, %v695
    %v697 = vsub.f32 1.5, %v696
    %v698 = vmul.f32 %v693, %v697
    %vm699 = vweird.f32 %v682
    %vm700 = vweird.f32 %v693
    %vm701 = vmor %vm699, %vm700
    %v702 = vsel %vm701, %v693, %v698
    %v703 = vmul.f32 %v679, %v692
    %v704 = vmul.f32 %v680, %v702
    %v705 = vmul.f32 %v704, 0.125
    %706 = vxpose.xlu0.b32.start [1/16] %v703, 128
    %707 = vxpose.xlu0.b32.cont [2/16] 0.0, 128
    %708 = vxpose.xlu0.b32.cont [3/16] 0.0, 128
    %709 = vxpose.xlu0.b32.cont [4/16] 0.0, 128
    %710 = vxpose.xlu0.b32.cont [5/16] 0.0, 128
    %711 = vxpose.xlu0.b32.cont [6/16] 0.0, 128
    %712 = vxpose.xlu0.b32.cont [7/16] 0.0, 128
    %713 = vxpose.xlu0.b32.cont [8/16] 0.0, 128
    %714 = vxpose.xlu0.b32.cont [9/16] 0.0, 128
    %715 = vxpose.xlu0.b32.cont [10/16] 0.0, 128
    %716 = vxpose.xlu0.b32.cont [11/16] 0.0, 128
    %717 = vxpose.xlu0.b32.cont [12/16] 0.0, 128
    %718 = vxpose.xlu0.b32.cont [13/16] 0.0, 128
    %719 = vxpose.xlu0.b32.cont [14/16] 0.0, 128
    %720 = vxpose.xlu0.b32.cont [15/16] 0.0, 128
    %721 = vxpose.xlu0.b32.end [16/16] 0.0, 128
    %v722 = vpop.trf.xlu0
    %v723 = vpop.trf.xlu0
    %v724 = vpop.trf.xlu0
    %v725 = vpop.trf.xlu0
    %v726 = vpop.trf.xlu0
    %v727 = vpop.trf.xlu0
    %v728 = vpop.trf.xlu0
    %v729 = vpop.trf.xlu0
    %v730 = vpop.trf.xlu0
    %v731 = vpop.trf.xlu0
    %v732 = vpop.trf.xlu0
    %v733 = vpop.trf.xlu0
    %v734 = vpop.trf.xlu0
    %v735 = vpop.trf.xlu0
    %v736 = vpop.trf.xlu0
    %v737 = vpop.trf.xlu0
    %vm738 = vcmask 64512
    %v740 = vsel %vm738, %v722, 0
    %v743 = vsel %vm738, %v723, 0
    %v746 = vsel %vm738, %v724, 0
    %v749 = vsel %vm738, %v725, 0
    %751 = vmatpush.msra.mxu0 0.0
    %752 = vmatpush.msra.mxu0 0.0
    %753 = vmatpush.msra.mxu0 0.0
    %754 = vmatpush.msra.mxu0 0.0
    %755 = vmatpush.msra.mxu0 0.0
    %756 = vmatpush.msra.mxu0 0.0
    %757 = vmatpush.msra.mxu0 0.0
    %758 = vmatpush.msra.mxu0 0.0
    %759 = vmatpush.msra.mxu0 0.0
    %760 = vmatpush.msra.mxu0 0.0
    %761 = vmatpush.msra.mxu0 0.0
    %762 = vmatpush.msra.mxu0 0.0
    %763 = vmatpush.msra.mxu0 0.0
    %764 = vmatpush.msra.mxu0 0.0
    %765 = vmatpush.msra.mxu0 0.0
    %766 = vmatpush.msra.mxu0 %v705
    %767 = vmatmul.f32.gmra.mxu0 %v740
    %v768 = vpop.f32.mrf.mxu0
    %v769 = vadd.f32 0.0, %v768
    %770 = vmatmul.f32.gmra.mxu0 %v743
    %v771 = vpop.f32.mrf.mxu0
    %v772 = vadd.f32 0.0, %v771
    %773 = vmatmul.f32.gmra.mxu0 %v746
    %v774 = vpop.f32.mrf.mxu0
    %v775 = vadd.f32 0.0, %v774
    %776 = vmatmul.f32.gmra.mxu0 %v749
    %v777 = vpop.f32.mrf.mxu0
    %v778 = vadd.f32 0.0, %v777
    %779 = vdwg.mxu0
    %v780 = vmul.f32 %v703, %v705
    %v781 = vsel %vm403, %v780, 0.0
    %v782 = vrot.slane %v781, 4
    %v783 = vadd.f32 %v781, %v782
    %v784 = vrot.slane %v783, 2
    %v785 = vadd.f32 %v783, %v784
    %v786 = vrot.slane %v785, 1
    %v787 = vadd.f32 %v785, %v786
    %v788 = vsub.f32 %v787, 1.0
    %v789 = vmul.f32 %v788, %v788
    %vm790 = vcmask 253952
    %v791 = vsel %vm790, %v789, 0.0
    %792 = vadd.xlane.f32.xlu0 %v791
    %v793 = vpop.xlane.xlu0 %792
    %v794 = vrot.slane %v793, 4
    %v795 = vadd.f32 %v793, %v794
    %v796 = vrot.slane %v795, 2
    %v797 = vadd.f32 %v795, %v796
    %v798 = vrot.slane %v797, 1
    %v799 = vadd.f32 %v797, %v798
    %s800 = vtos %v799
    %v801 = vmul.f32 %v769, %v769
    %v802 = vmul.f32 %v772, %v772
    %v803 = vmul.f32 %v775, %v775
    %v804 = vmul.f32 %v778, %v778
    %v805 = vsel %vm403, %v801, 0.0
    %v806 = vsel %vm403, %v802, 0.0
    %v807 = vadd.f32 %v805, %v806
    %v808 = vsel %vm403, %v803, 0.0
    %v809 = vadd.f32 %v807, %v808
    %v810 = vsel %vm403, %v804, 0.0
    %v811 = vadd.f32 %v809, %v810
    %812 = vadd.xlane.f32.xlu0 %v811
    %v813 = vpop.xlane.xlu0 %812
    %v814 = vrot.slane %v813, 4
    %v815 = vadd.f32 %v813, %v814
    %v816 = vrot.slane %v815, 2
    %v817 = vadd.f32 %v815, %v816
    %v818 = vrot.slane %v817, 1
    %v819 = vadd.f32 %v817, %v818
    %s820 = vtos %v819
    %v821 = vmul.f32 %v787, %v787
    %v822 = vsel %vm790, %v821, 0.0
    %823 = vadd.xlane.f32.xlu0 %v822
    %v824 = vpop.xlane.xlu0 %823
    %v825 = vrot.slane %v824, 4
    %v826 = vadd.f32 %v824, %v825
    %v827 = vrot.slane %v826, 2
    %v828 = vadd.f32 %v826, %v827
    %v829 = vrot.slane %v828, 1
    %v830 = vadd.f32 %v828, %v829
    %s831 = vtos %v830
    %s832 = ssub.f32 %s820, %s831
    %s833 = smul.f32 %s832, 0.0051
    %s834 = sadd.f32 %s800, %s833
    %s835 = scalar_lea.smem [#allocation10], 0
    %836 = sst [smem:[%s835]] %s834
    // Predicated region
    $region50: #{tpu_custom_call.1} parent=1 // pred_check
      _
    $region51: #{tpu_custom_call.1} parent=1 // pred_check_branch
      %838 = sbr.rel (0) target = $region53
    $region52: #{tpu_custom_call.1} parent=1 // pred_region
      %840 = vsyncadd [#allocation4], 0
      %s842 = sshll.u32 %s8, 4
      %s843 = int_to_ptr.hbm [resolvable:$true] %s842
      %845 = dma.smem_to_hbm [#allocation10], 16, %s843, [#allocation4]
    $region53: #{tpu_custom_call.1} parent=1 // pred_fallthru
      _
    // Predicated region
    $region54: #{tpu_custom_call.1} parent=1 // pred_check
      _
    $region55: #{tpu_custom_call.1} parent=1 // pred_check_branch
      %847 = sbr.rel (0) target = $region57
    $region56: #{tpu_custom_call.1} parent=1 // pred_region
      %849 = dma.done [#allocation4], 16
    $region57: #{tpu_custom_call.1} parent=1 // pred_fallthru
      _
    %850 = sfence
    %851 = vsyncpa [#allocation3], 1
    %852 = vsyncpa [#allocation6], 1
    %853 = vsyncpa [#allocation9], 1
    %854 = vsyncpa [#allocation4], 1

</llo_original>
